<compile_context>
chip_gen: v7x
topology: tpu7x:2x2x1
jax: 0.10.0
libtpu: 0.0.40
codegen_flags: <defaults>
</compile_context>

<pallas_src>
import jax
import jax.numpy as jnp
from jax.experimental import pallas as pl
from jax.experimental.pallas import tpu as pltpu

_MIB = 1024 * 1024
# Below this element count the launch / layout plumbing dominates; one fused
# XLA elementwise op is optimal.
_TINY_ELEMENTS = 64 * 1024


def _linreg_kernel(w_ref, b_ref, x_ref, o_ref):
    # w_ref, b_ref: SMEM refs of shape (1,) -- f32 scalar parameters
    # x_ref, o_ref: VMEM tiles of shape (tile_rows, lanes)
    w = w_ref[0]
    b = b_ref[0]
    # Math in f32 (safe on v5e's non-bf16 VPU), explicit cast on store so the
    # stored dtype always matches the output ref.
    o_ref[...] = (w * x_ref[...].astype(jnp.float32) + b).astype(o_ref.dtype)


def _sublane(dtype) -> int:
    """Native packed sublane multiple (8 for f32, 16 for bf16, 32 for int8/fp8)."""
    return max(8, 32 // jnp.dtype(dtype).itemsize)


def _vmem_capacity_bytes() -> int:
    try:
        return int(pltpu.get_tpu_info().vmem_capacity_bytes)
    except Exception:
        return 64 * _MIB  # conservative default (v7x per-TensorCore)


def _run_tiled(x2d, w, b, out_dtype):
    """Run the elementwise kernel over a 2-D slab of shape (rows, lanes)."""
    rows, lanes = x2d.shape
    in_item = jnp.dtype(x2d.dtype).itemsize
    out_item = jnp.dtype(out_dtype).itemsize
    sub = max(_sublane(x2d.dtype), _sublane(out_dtype))

    # ---- tile sizing: VMEM-capacity-aware per-array tile budget ------------
    # 1 input + 1 output, double-buffered => 4 live tiles.
    vmem_cap = _vmem_capacity_bytes()
    per_tile_budget = 16 * _MIB if vmem_cap >= 96 * _MIB else 8 * _MIB
    bytes_per_row = lanes * max(in_item, out_item)
    tile_rows = (per_tile_budget // max(bytes_per_row, 1)) // sub * sub
    tile_rows = min(rows, max(sub, tile_rows))

    # ---- megacore: multi-MiB slabs must produce >= 2 grid steps (v7x 2 TCs) --
    slab_bytes = rows * bytes_per_row
    if tile_rows >= rows and slab_bytes > 1 * _MIB and rows >= 2 * sub:
        tile_rows = max(sub, (rows // 2) // sub * sub)

    grid = (pl.cdiv(rows, tile_rows),)

    # ---- scoped VMEM: what the pipeline needs + headroom, not all of VMEM ---
    live_bytes = 2 * tile_rows * lanes * (in_item + out_item)
    vmem_limit = max(16 * _MIB, min(live_bytes + 8 * _MIB, vmem_cap - 16 * _MIB))

    return pl.pallas_call(
        _linreg_kernel,
        out_shape=jax.ShapeDtypeStruct((rows, lanes), out_dtype),
        grid_spec=pltpu.PrefetchScalarGridSpec(
            num_scalar_prefetch=0,
            grid=grid,
            in_specs=[
                pl.BlockSpec(memory_space=pltpu.SMEM),             # weights (1,)
                pl.BlockSpec(memory_space=pltpu.SMEM),             # bias    (1,)
                pl.BlockSpec((tile_rows, lanes), lambda i: (i, 0)),  # x tile
            ],
            out_specs=pl.BlockSpec((tile_rows, lanes), lambda i: (i, 0)),
        ),
        compiler_params=pltpu.CompilerParams(
            dimension_semantics=("parallel",),
            vmem_limit_bytes=int(vmem_limit),
        ),
    )(w, b, x2d)


def linear_regression_forward(x, weights, bias):
    """y = weights * x + bias, scalar broadcast (same semantics as the PyTorch module)."""
    orig_shape = x.shape
    out_dtype = jnp.result_type(x.dtype, weights.dtype, bias.dtype)
    total = int(x.size)

    if total == 0:
        return jnp.zeros(orig_shape, out_dtype)

    # Tiny inputs: one fused XLA op beats pad + kernel launch + slice.
    if total < _TINY_ELEMENTS:
        return weights[0] * x + bias[0]

    w = jnp.asarray(weights, jnp.float32).reshape(1)
    b = jnp.asarray(bias, jnp.float32).reshape(1)
    sub = max(_sublane(x.dtype), _sublane(out_dtype))
    max_item = max(jnp.dtype(x.dtype).itemsize, jnp.dtype(out_dtype).itemsize)

    # ---- layout selection (avoid extra HBM passes whenever possible) -------
    # (a) Already lane-dense: keep the caller's last dim as the lane axis,
    #     collapse leading dims (contiguous reshape, free). No pad, no slice.
    if x.ndim >= 2 and x.shape[-1] >= 128 and x.shape[-1] * max_item <= 2 * _MIB:
        lanes = x.shape[-1]
        out2d = _run_tiled(x.reshape(-1, lanes), w, b, out_dtype)
        return out2d.reshape(orig_shape)

    # (b) Narrow last dim (classic (N, 1)) / 1-D: flatten and look for a LANE
    #     that exactly divides the element count -> still no pad, no slice.
    for lane in (8192, 4096, 2048, 1024, 512, 256, 128):
        if total % lane == 0 and (total // lane) % sub == 0:
            out2d = _run_tiled(x.reshape(total // lane, lane), w, b, out_dtype)
            return out2d.reshape(orig_shape)

    # (c) Genuinely ragged size: pad + slice fallback (two extra HBM passes).
    lane = 1024
    rows = -(-total // lane)
    rows = max(sub, (rows + sub - 1) // sub * sub)
    padded = rows * lane
    x_flat = jnp.pad(jnp.ravel(x), (0, padded - total))
    out2d = _run_tiled(x_flat.reshape(rows, lane), w, b, out_dtype)
    return out2d.reshape(-1)[:total].reshape(orig_shape)


if __name__ == "__main__":
    key = jax.random.PRNGKey(0)
    k_w, k_b, k_x = jax.random.split(key, 3)

    # Parameters match nn.Parameter(torch.randn(1)) shapes / dtype
    weights = jax.random.normal(k_w, (1,), dtype=jnp.float32)
    bias = jax.random.normal(k_b, (1,), dtype=jnp.float32)

    # 1) Classic linear-regression input (N, 1): tiny -> fused-XLA fallback path.
    x_small = jax.random.normal(k_x, (64, 1), dtype=jnp.float32)
    y_small = jax.block_until_ready(linear_regression_forward(x_small, weights, bias))
    assert y_small.shape == x_small.shape
    assert jnp.allclose(y_small, weights[0] * x_small + bias[0], atol=1e-6, rtol=1e-6)

    # 2) Lane-dense 2-D input: direct Pallas path (no pad, no slice).
    x_dense = jax.random.normal(k_x, (1024, 128), dtype=jnp.float32)
    y_dense = jax.block_until_ready(linear_regression_forward(x_dense, weights, bias))
    assert jnp.allclose(y_dense, weights[0] * x_dense + bias[0], atol=1e-6, rtol=1e-6)

    # 3) Large (N, 1) column whose size divides a power-of-two LANE:
    #    flatten path, still no pad / no slice.
    x_col = jax.random.normal(k_x, (131072, 1), dtype=jnp.float32)
    y_col = jax.block_until_ready(linear_regression_forward(x_col, weights, bias))
    assert jnp.allclose(y_col, weights[0] * x_col + bias[0], atol=1e-6, rtol=1e-6)

    # 4) Ragged last dim >= 128: direct 2-D path, full-array lane block,
    #    >= 2 grid steps for megacore sharding.
    x_ragged = jax.random.normal(k_x, (4096, 257), dtype=jnp.float32)
    y_ragged = jax.block_until_ready(linear_regression_forward(x_ragged, weights, bias))
    assert jnp.allclose(y_ragged, weights[0] * x_ragged + bias[0], atol=1e-6, rtol=1e-6)

    print("KERNEL_OK")
</pallas_src>

<mosaic_0001>
module attributes {stable_mosaic.version = 11 : i64} {
  func.func @_linreg_kernel(%arg0: i32, %arg1: memref<1xf32, #tpu.memory_space<smem>>, %arg2: memref<1xf32, #tpu.memory_space<smem>>, %arg3: memref<1024x128xf32, #tpu.memory_space<vmem>>, %arg4: memref<1024x128xf32, #tpu.memory_space<vmem>>) attributes {dimension_semantics = [#tpu.dimension_semantics<parallel>], iteration_bounds = array<i64: 1>, scalar_prefetch = 0 : i64, scratch_operands = 0 : i64, tpu.core_type = #tpu.core_type<tc>, window_params = [{transform_indices = @transform_0, window_bounds = array<i64: 1>}, {transform_indices = @transform_1, window_bounds = array<i64: 1>}, {transform_indices = @transform_2, window_bounds = array<i64: 1024, 128>}, {transform_indices = @transform_3, window_bounds = array<i64: 1024, 128>}]} {
    %c0 = arith.constant 0 : index
    %0 = memref.load %arg1[%c0] : memref<1xf32, #tpu.memory_space<smem>>
    %c0_0 = arith.constant 0 : index
    %1 = memref.load %arg2[%c0_0] : memref<1xf32, #tpu.memory_space<smem>>
    %c0_1 = arith.constant 0 : index
    %c0_2 = arith.constant 0 : index
    %2 = vector.load %arg3[%c0_1, %c0_2] : memref<1024x128xf32, #tpu.memory_space<vmem>>, vector<1024x128xf32>
    %3 = vector.broadcast %0 : f32 to vector<1024x128xf32>
    %4 = arith.mulf %3, %2 : vector<1024x128xf32>
    %5 = vector.broadcast %1 : f32 to vector<1024x128xf32>
    %6 = arith.addf %4, %5 : vector<1024x128xf32>
    %c0_3 = arith.constant 0 : index
    %c0_4 = arith.constant 0 : index
    %7 = vector.load %arg4[%c0_3, %c0_4] : memref<1024x128xf32, #tpu.memory_space<vmem>>, vector<1024x128xf32>
    tpu.vector_store %arg4[%c0_3, %c0_4], %6 {strides = array<i32>} : memref<1024x128xf32, #tpu.memory_space<vmem>>, vector<1024x128xf32>,
    return
  }
  func.func @transform_0(%arg0: i32) -> i32 {
    %c0_i32 = arith.constant 0 : i32
    %c0_i32_0 = arith.constant 0 : i32
    return %c0_i32 : i32
  }
  func.func @transform_1(%arg0: i32) -> i32 {
    %c0_i32 = arith.constant 0 : i32
    %c0_i32_0 = arith.constant 0 : i32
    return %c0_i32 : i32
  }
  func.func @transform_2(%arg0: i32) -> (i32, i32) {
    %c0_i32 = arith.constant 0 : i32
    %c0_i32_0 = arith.constant 0 : i32
    return %arg0, %c0_i32 : i32, i32
  }
  func.func @transform_3(%arg0: i32) -> (i32, i32) {
    %c0_i32 = arith.constant 0 : i32
    %c0_i32_0 = arith.constant 0 : i32
    return %arg0, %c0_i32 : i32, i32
  }
}

</mosaic_0001>

<llo_original>
// kernel: tpu_custom_call.1
$region0: #{tpu_custom_call.1}
  #allocation0 [shape = 'u32[]', space=smem, size = 0x4, offset = 0x4, fixed_abs, tag = 'smem constant byte address 0x4 - core index']
  #allocation1 [shape = 'u32[144,128]{1,0:T(1,128)}', space=vmem, size = 0x12000, scoped, tag = 'internal scratch']
  #allocation2 [shape = 'f32[1]{0:T(128)S(6)}', space=smem, size = 0x200, scoped, tag = 'scoped memory for tpu_custom_call.1']
  #allocation3 [shape = 'f32[1]{0:T(128)S(6)}', space=smem, size = 0x200, scoped, tag = 'scoped memory for tpu_custom_call.1']
  %s0 = inlined_call_operand.<no memory space> [shape: f32[1], index: 0, kind: input, shape index: {}]
  %s1 = inlined_call_operand.<no memory space> [shape: f32[1], index: 1, kind: input, shape index: {}]
  %s2 = inlined_call_operand.hbm [shape: f32[1024,128], index: 2, kind: input, shape index: {}]
  %s3 = inlined_call_operand.hbm [shape: f32[1024,128], index: 3, kind: output, shape index: {}]
  %s4 = sld [smem:[#allocation0]]
  $region26: #{tpu_custom_call.1} parent=0
    _
  %s6 = ssub.s32 1, %s4
  %s7 = scalar_select 0, %s6, %s4
  %8 = sst [smem:[#allocation2]] %s0
  %9 = sst [smem:[#allocation3]] %s1
  $region1: #{tpu_custom_call.1} parent=0
    #allocation4 [shape = 'u8[524288]{0}', space=vmem, size = 0x80000, scoped, tag = 'input window, operand 2, single buffered']
    #allocation5 [shape = 's32[1]{0}', space=sflag, size = 0x4, scoped, tag = 'scoped memory for tpu_custom_call.1']
    #allocation6 [shape = 's32[1]{0}', space=sflag, size = 0x4, scoped, tag = 'scoped memory for tpu_custom_call.1']
    #allocation7 [shape = 'u8[524288]{0}', space=vmem, size = 0x80000, scoped, tag = 'output window, operand 0, single buffered']
    %10 = vsyncpa [#allocation5], 0
    %11 = vsyncpa [#allocation6], 0
    // Predicated region
    $region2: #{tpu_custom_call.1} parent=1 // pred_check
      _
    $region3: #{tpu_custom_call.1} parent=1 // pred_check_branch
      %13 = sbr.rel (0) target = $region5
    $region4: #{tpu_custom_call.1} parent=1 // pred_region
      _
    $region5: #{tpu_custom_call.1} parent=1 // pred_fallthru
      _
    // Predicated region
    $region6: #{tpu_custom_call.1} parent=1 // pred_check
      _
    $region7: #{tpu_custom_call.1} parent=1 // pred_check_branch
      %15 = sbr.rel (0) target = $region9
    $region8: #{tpu_custom_call.1} parent=1 // pred_region
      _
    $region9: #{tpu_custom_call.1} parent=1 // pred_fallthru
      _
    // Predicated region
    $region10: #{tpu_custom_call.1} parent=1 // pred_check
      _
    $region11: #{tpu_custom_call.1} parent=1 // pred_check_branch
      %17 = sbr.rel (0) target = $region13
    $region12: #{tpu_custom_call.1} parent=1 // pred_region
      %s19 = ssub.s32 16384, 16384
      %20 = vsyncadd [#allocation5], %s19
      %s21 = sshll.u32 [#allocation4], 4
      %s22 = int_to_ptr.vmem [resolvable:$true] %s21
      %27 = dma.hbm_to_vmem [thread:$0]  %s2, 16384, %s22, [#allocation5], 128, 128, 8
    $region13: #{tpu_custom_call.1} parent=1 // pred_fallthru
      _
    // Predicated region
    $region14: #{tpu_custom_call.1} parent=1 // pred_check
      _
    $region15: #{tpu_custom_call.1} parent=1 // pred_check_branch
      %29 = sbr.rel (0) target = $region17
    $region16: #{tpu_custom_call.1} parent=1 // pred_region
      %30 = dma.done [#allocation5], 16384
    $region17: #{tpu_custom_call.1} parent=1 // pred_fallthru
      _
    %s31 = sld [smem:[#allocation2]]
    %s32 = sld [smem:[#allocation3]]
    %v33 = vld [vmem:[#allocation4] sm:$0xff]
    %v34 = vld [vmem:[#allocation4 + $0x8] sm:$0xff]
    %v35 = vld [vmem:[#allocation4 + $0x10] sm:$0xff]
    %v36 = vld [vmem:[#allocation4 + $0x18] sm:$0xff]
    %v37 = vld [vmem:[#allocation4 + $0x20] sm:$0xff]
    %v38 = vld [vmem:[#allocation4 + $0x28] sm:$0xff]
    %v39 = vld [vmem:[#allocation4 + $0x30] sm:$0xff]
    %v40 = vld [vmem:[#allocation4 + $0x38] sm:$0xff]
    %v41 = vld [vmem:[#allocation4 + $0x40] sm:$0xff]
    %v42 = vld [vmem:[#allocation4 + $0x48] sm:$0xff]
    %v43 = vld [vmem:[#allocation4 + $0x50] sm:$0xff]
    %v44 = vld [vmem:[#allocation4 + $0x58] sm:$0xff]
    %v45 = vld [vmem:[#allocation4 + $0x60] sm:$0xff]
    %v46 = vld [vmem:[#allocation4 + $0x68] sm:$0xff]
    %v47 = vld [vmem:[#allocation4 + $0x70] sm:$0xff]
    %v48 = vld [vmem:[#allocation4 + $0x78] sm:$0xff]
    %v49 = vld [vmem:[#allocation4 + $0x80] sm:$0xff]
    %v50 = vld [vmem:[#allocation4 + $0x88] sm:$0xff]
    %v51 = vld [vmem:[#allocation4 + $0x90] sm:$0xff]
    %v52 = vld [vmem:[#allocation4 + $0x98] sm:$0xff]
    %v53 = vld [vmem:[#allocation4 + $0xa0] sm:$0xff]
    %v54 = vld [vmem:[#allocation4 + $0xa8] sm:$0xff]
    %v55 = vld [vmem:[#allocation4 + $0xb0] sm:$0xff]
    %v56 = vld [vmem:[#allocation4 + $0xb8] sm:$0xff]
    %v57 = vld [vmem:[#allocation4 + $0xc0] sm:$0xff]
    %v58 = vld [vmem:[#allocation4 + $0xc8] sm:$0xff]
    %v59 = vld [vmem:[#allocation4 + $0xd0] sm:$0xff]
    %v60 = vld [vmem:[#allocation4 + $0xd8] sm:$0xff]
    %v61 = vld [vmem:[#allocation4 + $0xe0] sm:$0xff]
    %v62 = vld [vmem:[#allocation4 + $0xe8] sm:$0xff]
    %v63 = vld [vmem:[#allocation4 + $0xf0] sm:$0xff]
    %v64 = vld [vmem:[#allocation4 + $0xf8] sm:$0xff]
    %v65 = vld [vmem:[#allocation4 + $0x100] sm:$0xff]
    %v66 = vld [vmem:[#allocation4 + $0x108] sm:$0xff]
    %v67 = vld [vmem:[#allocation4 + $0x110] sm:$0xff]
    %v68 = vld [vmem:[#allocation4 + $0x118] sm:$0xff]
    %v69 = vld [vmem:[#allocation4 + $0x120] sm:$0xff]
    %v70 = vld [vmem:[#allocation4 + $0x128] sm:$0xff]
    %v71 = vld [vmem:[#allocation4 + $0x130] sm:$0xff]
    %v72 = vld [vmem:[#allocation4 + $0x138] sm:$0xff]
    %v73 = vld [vmem:[#allocation4 + $0x140] sm:$0xff]
    %v74 = vld [vmem:[#allocation4 + $0x148] sm:$0xff]
    %v75 = vld [vmem:[#allocation4 + $0x150] sm:$0xff]
    %v76 = vld [vmem:[#allocation4 + $0x158] sm:$0xff]
    %v77 = vld [vmem:[#allocation4 + $0x160] sm:$0xff]
    %v78 = vld [vmem:[#allocation4 + $0x168] sm:$0xff]
    %v79 = vld [vmem:[#allocation4 + $0x170] sm:$0xff]
    %v80 = vld [vmem:[#allocation4 + $0x178] sm:$0xff]
    %v81 = vld [vmem:[#allocation4 + $0x180] sm:$0xff]
    %v82 = vld [vmem:[#allocation4 + $0x188] sm:$0xff]
    %v83 = vld [vmem:[#allocation4 + $0x190] sm:$0xff]
    %v84 = vld [vmem:[#allocation4 + $0x198] sm:$0xff]
    %v85 = vld [vmem:[#allocation4 + $0x1a0] sm:$0xff]
    %v86 = vld [vmem:[#allocation4 + $0x1a8] sm:$0xff]
    %v87 = vld [vmem:[#allocation4 + $0x1b0] sm:$0xff]
    %v88 = vld [vmem:[#allocation4 + $0x1b8] sm:$0xff]
    %v89 = vld [vmem:[#allocation4 + $0x1c0] sm:$0xff]
    %v90 = vld [vmem:[#allocation4 + $0x1c8] sm:$0xff]
    %v91 = vld [vmem:[#allocation4 + $0x1d0] sm:$0xff]
    %v92 = vld [vmem:[#allocation4 + $0x1d8] sm:$0xff]
    %v93 = vld [vmem:[#allocation4 + $0x1e0] sm:$0xff]
    %v94 = vld [vmem:[#allocation4 + $0x1e8] sm:$0xff]
    %v95 = vld [vmem:[#allocation4 + $0x1f0] sm:$0xff]
    %v96 = vld [vmem:[#allocation4 + $0x1f8] sm:$0xff]
    %v97 = vld [vmem:[#allocation4 + $0x200] sm:$0xff]
    %v98 = vld [vmem:[#allocation4 + $0x208] sm:$0xff]
    %v99 = vld [vmem:[#allocation4 + $0x210] sm:$0xff]
    %v100 = vld [vmem:[#allocation4 + $0x218] sm:$0xff]
    %v101 = vld [vmem:[#allocation4 + $0x220] sm:$0xff]
    %v102 = vld [vmem:[#allocation4 + $0x228] sm:$0xff]
    %v103 = vld [vmem:[#allocation4 + $0x230] sm:$0xff]
    %v104 = vld [vmem:[#allocation4 + $0x238] sm:$0xff]
    %v105 = vld [vmem:[#allocation4 + $0x240] sm:$0xff]
    %v106 = vld [vmem:[#allocation4 + $0x248] sm:$0xff]
    %v107 = vld [vmem:[#allocation4 + $0x250] sm:$0xff]
    %v108 = vld [vmem:[#allocation4 + $0x258] sm:$0xff]
    %v109 = vld [vmem:[#allocation4 + $0x260] sm:$0xff]
    %v110 = vld [vmem:[#allocation4 + $0x268] sm:$0xff]
    %v111 = vld [vmem:[#allocation4 + $0x270] sm:$0xff]
    %v112 = vld [vmem:[#allocation4 + $0x278] sm:$0xff]
    %v113 = vld [vmem:[#allocation4 + $0x280] sm:$0xff]
    %v114 = vld [vmem:[#allocation4 + $0x288] sm:$0xff]
    %v115 = vld [vmem:[#allocation4 + $0x290] sm:$0xff]
    %v116 = vld [vmem:[#allocation4 + $0x298] sm:$0xff]
    %v117 = vld [vmem:[#allocation4 + $0x2a0] sm:$0xff]
    %v118 = vld [vmem:[#allocation4 + $0x2a8] sm:$0xff]
    %v119 = vld [vmem:[#allocation4 + $0x2b0] sm:$0xff]
    %v120 = vld [vmem:[#allocation4 + $0x2b8] sm:$0xff]
    %v121 = vld [vmem:[#allocation4 + $0x2c0] sm:$0xff]
    %v122 = vld [vmem:[#allocation4 + $0x2c8] sm:$0xff]
    %v123 = vld [vmem:[#allocation4 + $0x2d0] sm:$0xff]
    %v124 = vld [vmem:[#allocation4 + $0x2d8] sm:$0xff]
    %v125 = vld [vmem:[#allocation4 + $0x2e0] sm:$0xff]
    %v126 = vld [vmem:[#allocation4 + $0x2e8] sm:$0xff]
    %v127 = vld [vmem:[#allocation4 + $0x2f0] sm:$0xff]
    %v128 = vld [vmem:[#allocation4 + $0x2f8] sm:$0xff]
    %v129 = vld [vmem:[#allocation4 + $0x300] sm:$0xff]
    %v130 = vld [vmem:[#allocation4 + $0x308] sm:$0xff]
    %v131 = vld [vmem:[#allocation4 + $0x310] sm:$0xff]
    %v132 = vld [vmem:[#allocation4 + $0x318] sm:$0xff]
    %v133 = vld [vmem:[#allocation4 + $0x320] sm:$0xff]
    %v134 = vld [vmem:[#allocation4 + $0x328] sm:$0xff]
    %v135 = vld [vmem:[#allocation4 + $0x330] sm:$0xff]
    %v136 = vld [vmem:[#allocation4 + $0x338] sm:$0xff]
    %v137 = vld [vmem:[#allocation4 + $0x340] sm:$0xff]
    %v138 = vld [vmem:[#allocation4 + $0x348] sm:$0xff]
    %v139 = vld [vmem:[#allocation4 + $0x350] sm:$0xff]
    %v140 = vld [vmem:[#allocation4 + $0x358] sm:$0xff]
    %v141 = vld [vmem:[#allocation4 + $0x360] sm:$0xff]
    %v142 = vld [vmem:[#allocation4 + $0x368] sm:$0xff]
    %v143 = vld [vmem:[#allocation4 + $0x370] sm:$0xff]
    %v144 = vld [vmem:[#allocation4 + $0x378] sm:$0xff]
    %v145 = vld [vmem:[#allocation4 + $0x380] sm:$0xff]
    %v146 = vld [vmem:[#allocation4 + $0x388] sm:$0xff]
    %v147 = vld [vmem:[#allocation4 + $0x390] sm:$0xff]
    %v148 = vld [vmem:[#allocation4 + $0x398] sm:$0xff]
    %v149 = vld [vmem:[#allocation4 + $0x3a0] sm:$0xff]
    %v150 = vld [vmem:[#allocation4 + $0x3a8] sm:$0xff]
    %v151 = vld [vmem:[#allocation4 + $0x3b0] sm:$0xff]
    %v152 = vld [vmem:[#allocation4 + $0x3b8] sm:$0xff]
    %v153 = vld [vmem:[#allocation4 + $0x3c0] sm:$0xff]
    %v154 = vld [vmem:[#allocation4 + $0x3c8] sm:$0xff]
    %v155 = vld [vmem:[#allocation4 + $0x3d0] sm:$0xff]
    %v156 = vld [vmem:[#allocation4 + $0x3d8] sm:$0xff]
    %v157 = vld [vmem:[#allocation4 + $0x3e0] sm:$0xff]
    %v158 = vld [vmem:[#allocation4 + $0x3e8] sm:$0xff]
    %v159 = vld [vmem:[#allocation4 + $0x3f0] sm:$0xff]
    %v160 = vld [vmem:[#allocation4 + $0x3f8] sm:$0xff]
    %v161 = vstv %s31
    %v162 = vmul.f32 %v161, %v33
    %v163 = vmul.f32 %v161, %v34
    %v164 = vmul.f32 %v161, %v35
    %v165 = vmul.f32 %v161, %v36
    %v166 = vmul.f32 %v161, %v37
    %v167 = vmul.f32 %v161, %v38
    %v168 = vmul.f32 %v161, %v39
    %v169 = vmul.f32 %v161, %v40
    %v170 = vmul.f32 %v161, %v41
    %v171 = vmul.f32 %v161, %v42
    %v172 = vmul.f32 %v161, %v43
    %v173 = vmul.f32 %v161, %v44
    %v174 = vmul.f32 %v161, %v45
    %v175 = vmul.f32 %v161, %v46
    %v176 = vmul.f32 %v161, %v47
    %v177 = vmul.f32 %v161, %v48
    %v178 = vmul.f32 %v161, %v49
    %v179 = vmul.f32 %v161, %v50
    %v180 = vmul.f32 %v161, %v51
    %v181 = vmul.f32 %v161, %v52
    %v182 = vmul.f32 %v161, %v53
    %v183 = vmul.f32 %v161, %v54
    %v184 = vmul.f32 %v161, %v55
    %v185 = vmul.f32 %v161, %v56
    %v186 = vmul.f32 %v161, %v57
    %v187 = vmul.f32 %v161, %v58
    %v188 = vmul.f32 %v161, %v59
    %v189 = vmul.f32 %v161, %v60
    %v190 = vmul.f32 %v161, %v61
    %v191 = vmul.f32 %v161, %v62
    %v192 = vmul.f32 %v161, %v63
    %v193 = vmul.f32 %v161, %v64
    %v194 = vmul.f32 %v161, %v65
    %v195 = vmul.f32 %v161, %v66
    %v196 = vmul.f32 %v161, %v67
    %v197 = vmul.f32 %v161, %v68
    %v198 = vmul.f32 %v161, %v69
    %v199 = vmul.f32 %v161, %v70
    %v200 = vmul.f32 %v161, %v71
    %v201 = vmul.f32 %v161, %v72
    %v202 = vmul.f32 %v161, %v73
    %v203 = vmul.f32 %v161, %v74
    %v204 = vmul.f32 %v161, %v75
    %v205 = vmul.f32 %v161, %v76
    %v206 = vmul.f32 %v161, %v77
    %v207 = vmul.f32 %v161, %v78
    %v208 = vmul.f32 %v161, %v79
    %v209 = vmul.f32 %v161, %v80
    %v210 = vmul.f32 %v161, %v81
    %v211 = vmul.f32 %v161, %v82
    %v212 = vmul.f32 %v161, %v83
    %v213 = vmul.f32 %v161, %v84
    %v214 = vmul.f32 %v161, %v85
    %v215 = vmul.f32 %v161, %v86
    %v216 = vmul.f32 %v161, %v87
    %v217 = vmul.f32 %v161, %v88
    %v218 = vmul.f32 %v161, %v89
    %v219 = vmul.f32 %v161, %v90
    %v220 = vmul.f32 %v161, %v91
    %v221 = vmul.f32 %v161, %v92
    %v222 = vmul.f32 %v161, %v93
    %v223 = vmul.f32 %v161, %v94
    %v224 = vmul.f32 %v161, %v95
    %v225 = vmul.f32 %v161, %v96
    %v226 = vmul.f32 %v161, %v97
    %v227 = vmul.f32 %v161, %v98
    %v228 = vmul.f32 %v161, %v99
    %v229 = vmul.f32 %v161, %v100
    %v230 = vmul.f32 %v161, %v101
    %v231 = vmul.f32 %v161, %v102
    %v232 = vmul.f32 %v161, %v103
    %v233 = vmul.f32 %v161, %v104
    %v234 = vmul.f32 %v161, %v105
    %v235 = vmul.f32 %v161, %v106
    %v236 = vmul.f32 %v161, %v107
    %v237 = vmul.f32 %v161, %v108
    %v238 = vmul.f32 %v161, %v109
    %v239 = vmul.f32 %v161, %v110
    %v240 = vmul.f32 %v161, %v111
    %v241 = vmul.f32 %v161, %v112
    %v242 = vmul.f32 %v161, %v113
    %v243 = vmul.f32 %v161, %v114
    %v244 = vmul.f32 %v161, %v115
    %v245 = vmul.f32 %v161, %v116
    %v246 = vmul.f32 %v161, %v117
    %v247 = vmul.f32 %v161, %v118
    %v248 = vmul.f32 %v161, %v119
    %v249 = vmul.f32 %v161, %v120
    %v250 = vmul.f32 %v161, %v121
    %v251 = vmul.f32 %v161, %v122
    %v252 = vmul.f32 %v161, %v123
    %v253 = vmul.f32 %v161, %v124
    %v254 = vmul.f32 %v161, %v125
    %v255 = vmul.f32 %v161, %v126
    %v256 = vmul.f32 %v161, %v127
    %v257 = vmul.f32 %v161, %v128
    %v258 = vmul.f32 %v161, %v129
    %v259 = vmul.f32 %v161, %v130
    %v260 = vmul.f32 %v161, %v131
    %v261 = vmul.f32 %v161, %v132
    %v262 = vmul.f32 %v161, %v133
    %v263 = vmul.f32 %v161, %v134
    %v264 = vmul.f32 %v161, %v135
    %v265 = vmul.f32 %v161, %v136
    %v266 = vmul.f32 %v161, %v137
    %v267 = vmul.f32 %v161, %v138
    %v268 = vmul.f32 %v161, %v139
    %v269 = vmul.f32 %v161, %v140
    %v270 = vmul.f32 %v161, %v141
    %v271 = vmul.f32 %v161, %v142
    %v272 = vmul.f32 %v161, %v143
    %v273 = vmul.f32 %v161, %v144
    %v274 = vmul.f32 %v161, %v145
    %v275 = vmul.f32 %v161, %v146
    %v276 = vmul.f32 %v161, %v147
    %v277 = vmul.f32 %v161, %v148
    %v278 = vmul.f32 %v161, %v149
    %v279 = vmul.f32 %v161, %v150
    %v280 = vmul.f32 %v161, %v151
    %v281 = vmul.f32 %v161, %v152
    %v282 = vmul.f32 %v161, %v153
    %v283 = vmul.f32 %v161, %v154
    %v284 = vmul.f32 %v161, %v155
    %v285 = vmul.f32 %v161, %v156
    %v286 = vmul.f32 %v161, %v157
    %v287 = vmul.f32 %v161, %v158
    %v288 = vmul.f32 %v161, %v159
    %v289 = vmul.f32 %v161, %v160
    %v290 = vstv %s32
    %v291 = vadd.f32 %v162, %v290
    %v292 = vadd.f32 %v163, %v290
    %v293 = vadd.f32 %v164, %v290
    %v294 = vadd.f32 %v165, %v290
    %v295 = vadd.f32 %v166, %v290
    %v296 = vadd.f32 %v167, %v290
    %v297 = vadd.f32 %v168, %v290
    %v298 = vadd.f32 %v169, %v290
    %v299 = vadd.f32 %v170, %v290
    %v300 = vadd.f32 %v171, %v290
    %v301 = vadd.f32 %v172, %v290
    %v302 = vadd.f32 %v173, %v290
    %v303 = vadd.f32 %v174, %v290
    %v304 = vadd.f32 %v175, %v290
    %v305 = vadd.f32 %v176, %v290
    %v306 = vadd.f32 %v177, %v290
    %v307 = vadd.f32 %v178, %v290
    %v308 = vadd.f32 %v179, %v290
    %v309 = vadd.f32 %v180, %v290
    %v310 = vadd.f32 %v181, %v290
    %v311 = vadd.f32 %v182, %v290
    %v312 = vadd.f32 %v183, %v290
    %v313 = vadd.f32 %v184, %v290
    %v314 = vadd.f32 %v185, %v290
    %v315 = vadd.f32 %v186, %v290
    %v316 = vadd.f32 %v187, %v290
    %v317 = vadd.f32 %v188, %v290
    %v318 = vadd.f32 %v189, %v290
    %v319 = vadd.f32 %v190, %v290
    %v320 = vadd.f32 %v191, %v290
    %v321 = vadd.f32 %v192, %v290
    %v322 = vadd.f32 %v193, %v290
    %v323 = vadd.f32 %v194, %v290
    %v324 = vadd.f32 %v195, %v290
    %v325 = vadd.f32 %v196, %v290
    %v326 = vadd.f32 %v197, %v290
    %v327 = vadd.f32 %v198, %v290
    %v328 = vadd.f32 %v199, %v290
    %v329 = vadd.f32 %v200, %v290
    %v330 = vadd.f32 %v201, %v290
    %v331 = vadd.f32 %v202, %v290
    %v332 = vadd.f32 %v203, %v290
    %v333 = vadd.f32 %v204, %v290
    %v334 = vadd.f32 %v205, %v290
    %v335 = vadd.f32 %v206, %v290
    %v336 = vadd.f32 %v207, %v290
    %v337 = vadd.f32 %v208, %v290
    %v338 = vadd.f32 %v209, %v290
    %v339 = vadd.f32 %v210, %v290
    %v340 = vadd.f32 %v211, %v290
    %v341 = vadd.f32 %v212, %v290
    %v342 = vadd.f32 %v213, %v290
    %v343 = vadd.f32 %v214, %v290
    %v344 = vadd.f32 %v215, %v290
    %v345 = vadd.f32 %v216, %v290
    %v346 = vadd.f32 %v217, %v290
    %v347 = vadd.f32 %v218, %v290
    %v348 = vadd.f32 %v219, %v290
    %v349 = vadd.f32 %v220, %v290
    %v350 = vadd.f32 %v221, %v290
    %v351 = vadd.f32 %v222, %v290
    %v352 = vadd.f32 %v223, %v290
    %v353 = vadd.f32 %v224, %v290
    %v354 = vadd.f32 %v225, %v290
    %v355 = vadd.f32 %v226, %v290
    %v356 = vadd.f32 %v227, %v290
    %v357 = vadd.f32 %v228, %v290
    %v358 = vadd.f32 %v229, %v290
    %v359 = vadd.f32 %v230, %v290
    %v360 = vadd.f32 %v231, %v290
    %v361 = vadd.f32 %v232, %v290
    %v362 = vadd.f32 %v233, %v290
    %v363 = vadd.f32 %v234, %v290
    %v364 = vadd.f32 %v235, %v290
    %v365 = vadd.f32 %v236, %v290
    %v366 = vadd.f32 %v237, %v290
    %v367 = vadd.f32 %v238, %v290
    %v368 = vadd.f32 %v239, %v290
    %v369 = vadd.f32 %v240, %v290
    %v370 = vadd.f32 %v241, %v290
    %v371 = vadd.f32 %v242, %v290
    %v372 = vadd.f32 %v243, %v290
    %v373 = vadd.f32 %v244, %v290
    %v374 = vadd.f32 %v245, %v290
    %v375 = vadd.f32 %v246, %v290
    %v376 = vadd.f32 %v247, %v290
    %v377 = vadd.f32 %v248, %v290
    %v378 = vadd.f32 %v249, %v290
    %v379 = vadd.f32 %v250, %v290
    %v380 = vadd.f32 %v251, %v290
    %v381 = vadd.f32 %v252, %v290
    %v382 = vadd.f32 %v253, %v290
    %v383 = vadd.f32 %v254, %v290
    %v384 = vadd.f32 %v255, %v290
    %v385 = vadd.f32 %v256, %v290
    %v386 = vadd.f32 %v257, %v290
    %v387 = vadd.f32 %v258, %v290
    %v388 = vadd.f32 %v259, %v290
    %v389 = vadd.f32 %v260, %v290
    %v390 = vadd.f32 %v261, %v290
    %v391 = vadd.f32 %v262, %v290
    %v392 = vadd.f32 %v263, %v290
    %v393 = vadd.f32 %v264, %v290
    %v394 = vadd.f32 %v265, %v290
    %v395 = vadd.f32 %v266, %v290
    %v396 = vadd.f32 %v267, %v290
    %v397 = vadd.f32 %v268, %v290
    %v398 = vadd.f32 %v269, %v290
    %v399 = vadd.f32 %v270, %v290
    %v400 = vadd.f32 %v271, %v290
    %v401 = vadd.f32 %v272, %v290
    %v402 = vadd.f32 %v273, %v290
    %v403 = vadd.f32 %v274, %v290
    %v404 = vadd.f32 %v275, %v290
    %v405 = vadd.f32 %v276, %v290
    %v406 = vadd.f32 %v277, %v290
    %v407 = vadd.f32 %v278, %v290
    %v408 = vadd.f32 %v279, %v290
    %v409 = vadd.f32 %v280, %v290
    %v410 = vadd.f32 %v281, %v290
    %v411 = vadd.f32 %v282, %v290
    %v412 = vadd.f32 %v283, %v290
    %v413 = vadd.f32 %v284, %v290
    %v414 = vadd.f32 %v285, %v290
    %v415 = vadd.f32 %v286, %v290
    %v416 = vadd.f32 %v287, %v290
    %v417 = vadd.f32 %v288, %v290
    %v418 = vadd.f32 %v289, %v290
    %419 = vst [vmem:[#allocation7] sm:$0xff] %v291
    %420 = vst [vmem:[#allocation7 + $0x8] sm:$0xff] %v292
    %421 = vst [vmem:[#allocation7 + $0x10] sm:$0xff] %v293
    %422 = vst [vmem:[#allocation7 + $0x18] sm:$0xff] %v294
    %423 = vst [vmem:[#allocation7 + $0x20] sm:$0xff] %v295
    %424 = vst [vmem:[#allocation7 + $0x28] sm:$0xff] %v296
    %425 = vst [vmem:[#allocation7 + $0x30] sm:$0xff] %v297
    %426 = vst [vmem:[#allocation7 + $0x38] sm:$0xff] %v298
    %427 = vst [vmem:[#allocation7 + $0x40] sm:$0xff] %v299
    %428 = vst [vmem:[#allocation7 + $0x48] sm:$0xff] %v300
    %429 = vst [vmem:[#allocation7 + $0x50] sm:$0xff] %v301
    %430 = vst [vmem:[#allocation7 + $0x58] sm:$0xff] %v302
    %431 = vst [vmem:[#allocation7 + $0x60] sm:$0xff] %v303
    %432 = vst [vmem:[#allocation7 + $0x68] sm:$0xff] %v304
    %433 = vst [vmem:[#allocation7 + $0x70] sm:$0xff] %v305
    %434 = vst [vmem:[#allocation7 + $0x78] sm:$0xff] %v306
    %435 = vst [vmem:[#allocation7 + $0x80] sm:$0xff] %v307
    %436 = vst [vmem:[#allocation7 + $0x88] sm:$0xff] %v308
    %437 = vst [vmem:[#allocation7 + $0x90] sm:$0xff] %v309
    %438 = vst [vmem:[#allocation7 + $0x98] sm:$0xff] %v310
    %439 = vst [vmem:[#allocation7 + $0xa0] sm:$0xff] %v311
    %440 = vst [vmem:[#allocation7 + $0xa8] sm:$0xff] %v312
    %441 = vst [vmem:[#allocation7 + $0xb0] sm:$0xff] %v313
    %442 = vst [vmem:[#allocation7 + $0xb8] sm:$0xff] %v314
    %443 = vst [vmem:[#allocation7 + $0xc0] sm:$0xff] %v315
    %444 = vst [vmem:[#allocation7 + $0xc8] sm:$0xff] %v316
    %445 = vst [vmem:[#allocation7 + $0xd0] sm:$0xff] %v317
    %446 = vst [vmem:[#allocation7 + $0xd8] sm:$0xff] %v318
    %447 = vst [vmem:[#allocation7 + $0xe0] sm:$0xff] %v319
    %448 = vst [vmem:[#allocation7 + $0xe8] sm:$0xff] %v320
    %449 = vst [vmem:[#allocation7 + $0xf0] sm:$0xff] %v321
    %450 = vst [vmem:[#allocation7 + $0xf8] sm:$0xff] %v322
    %451 = vst [vmem:[#allocation7 + $0x100] sm:$0xff] %v323
    %452 = vst [vmem:[#allocation7 + $0x108] sm:$0xff] %v324
    %453 = vst [vmem:[#allocation7 + $0x110] sm:$0xff] %v325
    %454 = vst [vmem:[#allocation7 + $0x118] sm:$0xff] %v326
    %455 = vst [vmem:[#allocation7 + $0x120] sm:$0xff] %v327
    %456 = vst [vmem:[#allocation7 + $0x128] sm:$0xff] %v328
    %457 = vst [vmem:[#allocation7 + $0x130] sm:$0xff] %v329
    %458 = vst [vmem:[#allocation7 + $0x138] sm:$0xff] %v330
    %459 = vst [vmem:[#allocation7 + $0x140] sm:$0xff] %v331
    %460 = vst [vmem:[#allocation7 + $0x148] sm:$0xff] %v332
    %461 = vst [vmem:[#allocation7 + $0x150] sm:$0xff] %v333
    %462 = vst [vmem:[#allocation7 + $0x158] sm:$0xff] %v334
    %463 = vst [vmem:[#allocation7 + $0x160] sm:$0xff] %v335
    %464 = vst [vmem:[#allocation7 + $0x168] sm:$0xff] %v336
    %465 = vst [vmem:[#allocation7 + $0x170] sm:$0xff] %v337
    %466 = vst [vmem:[#allocation7 + $0x178] sm:$0xff] %v338
    %467 = vst [vmem:[#allocation7 + $0x180] sm:$0xff] %v339
    %468 = vst [vmem:[#allocation7 + $0x188] sm:$0xff] %v340
    %469 = vst [vmem:[#allocation7 + $0x190] sm:$0xff] %v341
    %470 = vst [vmem:[#allocation7 + $0x198] sm:$0xff] %v342
    %471 = vst [vmem:[#allocation7 + $0x1a0] sm:$0xff] %v343
    %472 = vst [vmem:[#allocation7 + $0x1a8] sm:$0xff] %v344
    %473 = vst [vmem:[#allocation7 + $0x1b0] sm:$0xff] %v345
    %474 = vst [vmem:[#allocation7 + $0x1b8] sm:$0xff] %v346
    %475 = vst [vmem:[#allocation7 + $0x1c0] sm:$0xff] %v347
    %476 = vst [vmem:[#allocation7 + $0x1c8] sm:$0xff] %v348
    %477 = vst [vmem:[#allocation7 + $0x1d0] sm:$0xff] %v349
    %478 = vst [vmem:[#allocation7 + $0x1d8] sm:$0xff] %v350
    %479 = vst [vmem:[#allocation7 + $0x1e0] sm:$0xff] %v351
    %480 = vst [vmem:[#allocation7 + $0x1e8] sm:$0xff] %v352
    %481 = vst [vmem:[#allocation7 + $0x1f0] sm:$0xff] %v353
    %482 = vst [vmem:[#allocation7 + $0x1f8] sm:$0xff] %v354
    %483 = vst [vmem:[#allocation7 + $0x200] sm:$0xff] %v355
    %484 = vst [vmem:[#allocation7 + $0x208] sm:$0xff] %v356
    %485 = vst [vmem:[#allocation7 + $0x210] sm:$0xff] %v357
    %486 = vst [vmem:[#allocation7 + $0x218] sm:$0xff] %v358
    %487 = vst [vmem:[#allocation7 + $0x220] sm:$0xff] %v359
    %488 = vst [vmem:[#allocation7 + $0x228] sm:$0xff] %v360
    %489 = vst [vmem:[#allocation7 + $0x230] sm:$0xff] %v361
    %490 = vst [vmem:[#allocation7 + $0x238] sm:$0xff] %v362
    %491 = vst [vmem:[#allocation7 + $0x240] sm:$0xff] %v363
    %492 = vst [vmem:[#allocation7 + $0x248] sm:$0xff] %v364
    %493 = vst [vmem:[#allocation7 + $0x250] sm:$0xff] %v365
    %494 = vst [vmem:[#allocation7 + $0x258] sm:$0xff] %v366
    %495 = vst [vmem:[#allocation7 + $0x260] sm:$0xff] %v367
    %496 = vst [vmem:[#allocation7 + $0x268] sm:$0xff] %v368
    %497 = vst [vmem:[#allocation7 + $0x270] sm:$0xff] %v369
    %498 = vst [vmem:[#allocation7 + $0x278] sm:$0xff] %v370
    %499 = vst [vmem:[#allocation7 + $0x280] sm:$0xff] %v371
    %500 = vst [vmem:[#allocation7 + $0x288] sm:$0xff] %v372
    %501 = vst [vmem:[#allocation7 + $0x290] sm:$0xff] %v373
    %502 = vst [vmem:[#allocation7 + $0x298] sm:$0xff] %v374
    %503 = vst [vmem:[#allocation7 + $0x2a0] sm:$0xff] %v375
    %504 = vst [vmem:[#allocation7 + $0x2a8] sm:$0xff] %v376
    %505 = vst [vmem:[#allocation7 + $0x2b0] sm:$0xff] %v377
    %506 = vst [vmem:[#allocation7 + $0x2b8] sm:$0xff] %v378
    %507 = vst [vmem:[#allocation7 + $0x2c0] sm:$0xff] %v379
    %508 = vst [vmem:[#allocation7 + $0x2c8] sm:$0xff] %v380
    %509 = vst [vmem:[#allocation7 + $0x2d0] sm:$0xff] %v381
    %510 = vst [vmem:[#allocation7 + $0x2d8] sm:$0xff] %v382
    %511 = vst [vmem:[#allocation7 + $0x2e0] sm:$0xff] %v383
    %512 = vst [vmem:[#allocation7 + $0x2e8] sm:$0xff] %v384
    %513 = vst [vmem:[#allocation7 + $0x2f0] sm:$0xff] %v385
    %514 = vst [vmem:[#allocation7 + $0x2f8] sm:$0xff] %v386
    %515 = vst [vmem:[#allocation7 + $0x300] sm:$0xff] %v387
    %516 = vst [vmem:[#allocation7 + $0x308] sm:$0xff] %v388
    %517 = vst [vmem:[#allocation7 + $0x310] sm:$0xff] %v389
    %518 = vst [vmem:[#allocation7 + $0x318] sm:$0xff] %v390
    %519 = vst [vmem:[#allocation7 + $0x320] sm:$0xff] %v391
    %520 = vst [vmem:[#allocation7 + $0x328] sm:$0xff] %v392
    %521 = vst [vmem:[#allocation7 + $0x330] sm:$0xff] %v393
    %522 = vst [vmem:[#allocation7 + $0x338] sm:$0xff] %v394
    %523 = vst [vmem:[#allocation7 + $0x340] sm:$0xff] %v395
    %524 = vst [vmem:[#allocation7 + $0x348] sm:$0xff] %v396
    %525 = vst [vmem:[#allocation7 + $0x350] sm:$0xff] %v397
    %526 = vst [vmem:[#allocation7 + $0x358] sm:$0xff] %v398
    %527 = vst [vmem:[#allocation7 + $0x360] sm:$0xff] %v399
    %528 = vst [vmem:[#allocation7 + $0x368] sm:$0xff] %v400
    %529 = vst [vmem:[#allocation7 + $0x370] sm:$0xff] %v401
    %530 = vst [vmem:[#allocation7 + $0x378] sm:$0xff] %v402
    %531 = vst [vmem:[#allocation7 + $0x380] sm:$0xff] %v403
    %532 = vst [vmem:[#allocation7 + $0x388] sm:$0xff] %v404
    %533 = vst [vmem:[#allocation7 + $0x390] sm:$0xff] %v405
    %534 = vst [vmem:[#allocation7 + $0x398] sm:$0xff] %v406
    %535 = vst [vmem:[#allocation7 + $0x3a0] sm:$0xff] %v407
    %536 = vst [vmem:[#allocation7 + $0x3a8] sm:$0xff] %v408
    %537 = vst [vmem:[#allocation7 + $0x3b0] sm:$0xff] %v409
    %538 = vst [vmem:[#allocation7 + $0x3b8] sm:$0xff] %v410
    %539 = vst [vmem:[#allocation7 + $0x3c0] sm:$0xff] %v411
    %540 = vst [vmem:[#allocation7 + $0x3c8] sm:$0xff] %v412
    %541 = vst [vmem:[#allocation7 + $0x3d0] sm:$0xff] %v413
    %542 = vst [vmem:[#allocation7 + $0x3d8] sm:$0xff] %v414
    %543 = vst [vmem:[#allocation7 + $0x3e0] sm:$0xff] %v415
    %544 = vst [vmem:[#allocation7 + $0x3e8] sm:$0xff] %v416
    %545 = vst [vmem:[#allocation7 + $0x3f0] sm:$0xff] %v417
    %546 = vst [vmem:[#allocation7 + $0x3f8] sm:$0xff] %v418
    // Predicated region
    $region18: #{tpu_custom_call.1} parent=1 // pred_check
      _
    $region19: #{tpu_custom_call.1} parent=1 // pred_check_branch
      %548 = sbr.rel (0) target = $region21
    $region20: #{tpu_custom_call.1} parent=1 // pred_region
      %s550 = ssub.s32 16384, 16384
      %551 = vsyncadd [#allocation6], %s550
      %s552 = sshll.u32 [#allocation7], 4
      %s553 = int_to_ptr.vmem [resolvable:$true] %s552
      %558 = dma.vmem_to_hbm [thread:$0]  %s553, 16384, %s3, [#allocation6], 128, 128, 8
    $region21: #{tpu_custom_call.1} parent=1 // pred_fallthru
      _
    // Predicated region
    $region22: #{tpu_custom_call.1} parent=1 // pred_check
      _
    $region23: #{tpu_custom_call.1} parent=1 // pred_check_branch
      %560 = sbr.rel (0) target = $region25
    $region24: #{tpu_custom_call.1} parent=1 // pred_region
      %561 = dma.done [#allocation6], 16384
    $region25: #{tpu_custom_call.1} parent=1 // pred_fallthru
      _
    %562 = vsyncpa [#allocation5], 1
    %563 = vsyncpa [#allocation6], 1

</llo_original>
